<compile_context>
chip_gen: v6e
topology: v6e:2x2x1
jax: 0.10.0
libtpu: 0.0.40
codegen_flags: <defaults>
</compile_context>

<pallas_src>
import functools
import math

import numpy as np
import jax
import jax.numpy as jnp
from jax.experimental import pallas as pl
from jax.experimental.pallas import tpu as pltpu


def calc_dim(all_freq):
    # matches calc_ind(0, all_freq)[2]
    return 4 * all_freq * all_freq + 4 * all_freq + 1


def build_embed_tables(all_freq, omega):
    """Encode every Embedder basis function k as
         sin(x0 * A0[k] + P0[k]) * sin(x1 * A1[k] + P1[k])
       using cos(z) = sin(z + pi/2).  Returns (A0, P0, A1, P1), each (dim,)."""
    entries = [(0.0, 'c', 0.0, 'c')]                    # the constant 1
    pfns = [('c', 'c'), ('c', 's'), ('s', 'c'), ('s', 's')]
    for f in range(1, all_freq + 1):
        entries.append((f, 's', 0, 'c'))                # sin(x0*f)
        entries.append((f, 'c', 0, 'c'))                # cos(x0*f)
        entries.append((0, 'c', f, 's'))                # sin(x1*f)
        entries.append((0, 'c', f, 'c'))                # cos(x1*f)
        for ft in range(1, f):
            for (ta, tb) in pfns:
                entries.append((f, ta, ft, tb))
                entries.append((ft, ta, f, tb))
        for (ta, tb) in pfns:
            entries.append((f, ta, f, tb))
    dim = calc_dim(all_freq)
    assert len(entries) == dim
    A0 = np.zeros((dim,), np.float64); P0 = np.zeros((dim,), np.float64)
    A1 = np.zeros((dim,), np.float64); P1 = np.zeros((dim,), np.float64)
    for k, (fx, tx, fy, ty) in enumerate(entries):
        A0[k] = fx * omega
        P0[k] = 0.0 if tx == 's' else math.pi / 2.0
        A1[k] = fy * omega
        P1[k] = 0.0 if ty == 's' else math.pi / 2.0
    return A0, P0, A1, P1


def build_render_tables(H, W, h, w, all_freq, omega, tq):
    """Host-precomputed static tables.

    Returns
      GM  : (H*W, NT*4*tq) f32  one-hot gather columns, tile-major / tap / query
      WB  : (D,   NT*4*tq) f32  basis * area-blend weight, tiled over the 3 colors
      SEL : (8, D)         f32  per-color row selector (rows 3..7 zero)
      D   : packed feature row count (= round8(3*dim))
    """
    dim = calc_dim(all_freq)
    D = ((3 * dim + 7) // 8) * 8
    Q = h * w
    NT = Q // tq
    HW = H * W
    A0, P0, A1, P1 = build_embed_tables(all_freq, omega)

    qi = np.arange(Q) // w
    qj = np.arange(Q) % w
    cx0 = -1.0 + 1.0 / h + 2.0 / h * qi                 # make_coord dim 0
    cy0 = -1.0 + 1.0 / w + 2.0 / w * qj                 # make_coord dim 1
    rX, rY, eps = 1.0 / H, 1.0 / W, 1e-6

    flats, bases, areas = [], [], []
    for vx in (-1.0, 1.0):
        for vy in (-1.0, 1.0):
            cx = np.clip(cx0 + vx * rX + eps, -1.0 + 1e-6, 1.0 - 1e-6)
            cy = np.clip(cy0 + vy * rY + eps, -1.0 + 1e-6, 1.0 - 1e-6)
            # F.grid_sample(..., mode='nearest', align_corners=False)
            ix = np.clip(np.floor(((cx + 1.0) * H - 1.0) * 0.5 + 0.5), 0, H - 1)
            iy = np.clip(np.floor(((cy + 1.0) * W - 1.0) * 0.5 + 0.5), 0, W - 1)
            relx = (cx0 - (-1.0 + rX + 2.0 * rX * ix)) * H
            rely = (cy0 - (-1.0 + rY + 2.0 * rY * iy)) * W
            flats.append((ix * W + iy).astype(np.int64))
            bases.append(np.sin(relx[:, None] * A0[None, :] + P0[None, :]) *
                         np.sin(rely[:, None] * A1[None, :] + P1[None, :]))
            areas.append(np.abs(relx * rely) + 1e-9)

    tot = areas[0] + areas[1] + areas[2] + areas[3]
    weights = [areas[3] / tot, areas[2] / tot, areas[1] / tot, areas[0] / tot]

    GM = np.zeros((HW, NT * 4 * tq), np.float32)
    WB = np.zeros((D, NT * 4 * tq), np.float32)
    rows = np.arange(HW)[:, None]
    for j in range(NT):
        qs = slice(j * tq, (j + 1) * tq)
        for t in range(4):
            c0 = j * 4 * tq + t * tq
            GM[:, c0:c0 + tq] = (rows == flats[t][qs][None, :]).astype(np.float32)
            wbt = (bases[t][qs] * weights[t][qs, None]).T.astype(np.float32)  # (dim, tq)
            for c in range(3):
                WB[c * dim:(c + 1) * dim, c0:c0 + tq] = wbt
    SEL = np.zeros((8, D), np.float32)
    for c in range(3):
        SEL[c, c * dim:(c + 1) * dim] = 1.0
    return GM, WB, SEL, D


def _render_kernel(feat_ref, gm_ref, wb_ref, sel_ref, out_ref, *, tq):
    """feat_ref: (1, D, H*W) f32   gm_ref: (H*W, 4*tq) bf16
       wb_ref:   (D, 4*tq)   f32   sel_ref: (8, D) f32    out_ref: (1, 3, tq) f32"""
    # 1) gather the Fourier coefficients of all 4 taps for every query in the
    #    tile with one MXU matmul (columns are tap-major, query-minor).
    #    GM is exact 0/1 so the bf16 storage (half the DMA) loses no precision.
    gm = gm_ref[...].astype(jnp.float32)
    g = jnp.dot(feat_ref[0], gm, preferred_element_type=jnp.float32)   # (D, 4*tq)
    # 2) multiply by the precomputed weighted orthogonal-PE basis
    #    (area-blend weights already folded in on the host).
    p = g * wb_ref[...]                                                # (D, 4*tq)
    # 3) sum the 4 taps first with lane-block adds (shrinks the next matmul 4x).
    s4 = (p[:, 0:tq] + p[:, tq:2 * tq] +
          p[:, 2 * tq:3 * tq] + p[:, 3 * tq:4 * tq])                   # (D, tq)
    # 4) per-color reduction over the packed feature rows on the MXU;
    #    result is lane-dense (3, tq).
    o = jnp.dot(sel_ref[...], s4, preferred_element_type=jnp.float32)  # (8, tq)
    out_ref[0] = o[0:3, :]


def _pick_tq(Q, HW, D):
    """Largest query tile (multiple of 128, dividing Q, <=1024) whose
    double-buffered GM+WB tiles fit a conservative VMEM budget."""
    budget = 8 * 1024 * 1024
    best = None
    t = 128
    while t <= min(Q, 1024):
        if Q % t == 0:
            need = 2 * (HW * 4 * t * 2 + D * 4 * t * 4)   # 2 bufs: GM bf16 + WB f32
            if need <= budget:
                best = t
        t += 128
    if best is None:
        best = 128 if Q % 128 == 0 else Q
    return best


def fourier_render_patch_int(img_feature, h=16, w=16, all_freq=2,
                             omega=0.5 * math.pi, tq=None):
    """JAX/Pallas equivalent of Fourier_render_patch_int(all_freq, omega)(img_feature, h, w)."""
    img_feature = img_feature.astype(jnp.float32)
    N, C, H, W = img_feature.shape
    dim = calc_dim(all_freq)
    assert C == 3 * dim, "img_feature channels must equal 3 * (4f^2+4f+1)"
    Q = h * w
    HW = H * W
    D = ((3 * dim + 7) // 8) * 8
    if tq is None:
        tq = _pick_tq(Q, HW, D)
    assert Q % tq == 0, "tq must divide h*w"
    NT = Q // tq

    GM, WB, SEL, D = build_render_tables(H, W, h, w, all_freq, omega, tq)
    GM = jnp.asarray(GM).astype(jnp.bfloat16)   # 0/1 one-hot: exact in bf16
    WB, SEL = jnp.asarray(WB), jnp.asarray(SEL)

    # (N, 3*dim, H, W) -> (N, D, H*W): all 3 colors packed into one row group.
    feat = img_feature.reshape(N, 3 * dim, HW)
    feat = jnp.pad(feat, ((0, 0), (0, D - 3 * dim), (0, 0)))

    cost = pl.CostEstimate(
        flops=int(N * NT * (2 * D * HW * 4 * tq          # gather matmul
                            + 4 * D * tq                 # WB mult + tap adds
                            + 2 * 8 * D * tq)),          # selector matmul
        transcendentals=0,
        bytes_accessed=int(GM.size * 2 + WB.size * 4 + SEL.size * 4
                           + N * NT * D * HW * 4 + N * 3 * Q * 4),
    )

    kernel = functools.partial(_render_kernel, tq=tq)
    # Grid (NT, N): query-tile axis OUTER so the large GM/WB tiles are DMA'd
    # once per tile and reused across the batch; only the small per-batch
    # feature block is re-fetched every step.
    out = pl.pallas_call(
        kernel,
        out_shape=jax.ShapeDtypeStruct((N, 3, Q), jnp.float32),
        grid_spec=pltpu.PrefetchScalarGridSpec(
            num_scalar_prefetch=0,
            grid=(NT, N),
            in_specs=[
                pl.BlockSpec((1, D, HW), lambda j, n: (n, 0, 0)),
                pl.BlockSpec((HW, 4 * tq), lambda j, n: (0, j)),
                pl.BlockSpec((D, 4 * tq), lambda j, n: (0, j)),
                pl.BlockSpec((8, D), lambda j, n: (0, 0)),
            ],
            out_specs=pl.BlockSpec((1, 3, tq), lambda j, n: (n, 0, j)),
        ),
        compiler_params=pltpu.CompilerParams(
            dimension_semantics=("parallel", "parallel")),
        cost_estimate=cost,
    )(feat, GM, WB, SEL)

    # (N, 3, Q) -> (N, 3, h, w): free reshape, no transpose.
    return out.reshape(N, 3, h, w)


def reference_jax(img_feature, h, w, all_freq, omega):
    """Pure-JAX reference mirroring the PyTorch forward (for self-check)."""
    img_feature = img_feature.astype(jnp.float32)
    N, C, H, W = img_feature.shape
    dim = calc_dim(all_freq)
    A0, P0, A1, P1 = [jnp.asarray(a.astype(np.float32))
                      for a in build_embed_tables(all_freq, omega)]

    ii = np.arange(h * w) // w
    jj = np.arange(h * w) % w
    cx0 = jnp.asarray((-1.0 + 1.0 / h + 2.0 / h * ii).astype(np.float32))
    cy0 = jnp.asarray((-1.0 + 1.0 / w + 2.0 / w * jj).astype(np.float32))
    feat_flat = img_feature.reshape(N, 3, dim, H * W)

    preds, areas = [], []
    for vx in (-1.0, 1.0):
        for vy in (-1.0, 1.0):
            cx = jnp.clip(cx0 + vx / H + 1e-6, -1 + 1e-6, 1 - 1e-6)
            cy = jnp.clip(cy0 + vy / W + 1e-6, -1 + 1e-6, 1 - 1e-6)
            ix = jnp.clip(jnp.floor(((cx + 1) * H - 1) * 0.5 + 0.5), 0, H - 1)
            iy = jnp.clip(jnp.floor(((cy + 1) * W - 1) * 0.5 + 0.5), 0, W - 1)
            relx = (cx0 - (-1.0 + 1.0 / H + 2.0 / H * ix)) * H
            rely = (cy0 - (-1.0 + 1.0 / W + 2.0 / W * iy)) * W
            flat = (ix * W + iy).astype(jnp.int32)
            g = feat_flat[:, :, :, flat]                                 # (N,3,dim,Q)
            basis = (jnp.sin(relx[:, None] * A0[None, :] + P0[None, :]) *
                     jnp.sin(rely[:, None] * A1[None, :] + P1[None, :]))  # (Q,dim)
            preds.append(jnp.einsum('ncdq,qd->nqc', g, basis))
            areas.append(jnp.abs(relx * rely) + 1e-9)
    tot = sum(areas)
    sw = [areas[3], areas[2], areas[1], areas[0]]
    ret = sum(p * (a / tot)[None, :, None] for p, a in zip(preds, sw))
    return ret.reshape(N, h, w, 3).transpose(0, 3, 1, 2)


if __name__ == "__main__":
    key = jax.random.PRNGKey(0)
    all_freq = 2
    omega = 0.5 * math.pi
    dim = calc_dim(all_freq)                 # 25 -> 75 feature channels
    N, H, W = 2, 8, 8
    h_out = w_out = 16

    img_feature = jax.random.normal(key, (N, 3 * dim, H, W), dtype=jnp.float32)

    out = fourier_render_patch_int(img_feature, h=h_out, w=w_out,
                                   all_freq=all_freq, omega=omega)
    out = jax.block_until_ready(out)
    assert out.shape == (N, 3, h_out, w_out)

    ref = jax.block_until_ready(reference_jax(img_feature, h_out, w_out,
                                              all_freq, omega))
    if not bool(jnp.allclose(out, ref, rtol=1e-4, atol=1e-4)):
        raise AssertionError("Pallas kernel output mismatch vs JAX reference")

    print("KERNEL_OK")
</pallas_src>

<mosaic_0001>
module attributes {stable_mosaic.version = 11 : i64} {
  func.func @_render_kernel(%arg0: i32, %arg1: i32, %arg2: memref<1x80x64xf32, #tpu.memory_space<vmem>>, %arg3: memref<64x1024xbf16, #tpu.memory_space<vmem>>, %arg4: memref<80x1024xf32, #tpu.memory_space<vmem>>, %arg5: memref<8x80xf32, #tpu.memory_space<vmem>>, %arg6: memref<1x3x256xf32, #tpu.memory_space<vmem>>) attributes {dimension_semantics = [#tpu.dimension_semantics<parallel>, #tpu.dimension_semantics<parallel>], iteration_bounds = array<i64: 1, 2>, scalar_prefetch = 0 : i64, scratch_operands = 0 : i64, tpu.core_type = #tpu.core_type<tc>, window_params = [{transform_indices = @transform_0, window_bounds = array<i64: 1, 80, 64>}, {transform_indices = @transform_1, window_bounds = array<i64: 64, 1024>}, {transform_indices = @transform_2, window_bounds = array<i64: 80, 1024>}, {pipeline_mode = #tpu.pipeline_mode<synchronous>, transform_indices = @transform_3, window_bounds = array<i64: 8, 80>}, {transform_indices = @transform_4, window_bounds = array<i64: 1, 3, 256>}]} {
    %c0 = arith.constant 0 : index
    %c0_0 = arith.constant 0 : index
    %0 = vector.load %arg3[%c0, %c0_0] : memref<64x1024xbf16, #tpu.memory_space<vmem>>, vector<64x1024xbf16>
    %1 = arith.extf %0 : vector<64x1024xbf16> to vector<64x1024xf32>
    %c0_1 = arith.constant 0 : index
    %c0_2 = arith.constant 0 : index
    %c0_3 = arith.constant 0 : index
    %2 = vector.load %arg2[%c0_1, %c0_2, %c0_3] : memref<1x80x64xf32, #tpu.memory_space<vmem>>, vector<1x80x64xf32>
    %3 = vector.shape_cast %2 : vector<1x80x64xf32> to vector<80x64xf32>
    %cst = arith.constant dense<0.000000e+00> : vector<80x1024xf32>
    %4 = tpu.matmul %3, %1, %cst {dimension_numbers = #tpu.dot_dimension_numbers<[1], [0], [0], [1], [0, 0, 1, 1], [], []>} : vector<80x64xf32>, vector<64x1024xf32>, vector<80x1024xf32> -> vector<80x1024xf32>
    %c0_4 = arith.constant 0 : index
    %c0_5 = arith.constant 0 : index
    %5 = vector.load %arg4[%c0_4, %c0_5] : memref<80x1024xf32, #tpu.memory_space<vmem>>, vector<80x1024xf32>
    %6 = arith.mulf %4, %5 : vector<80x1024xf32>
    %7 = vector.extract_strided_slice %6 {offsets = [0, 0], sizes = [80, 256], strides = [1, 1]} : vector<80x1024xf32> to vector<80x256xf32>
    %8 = vector.extract_strided_slice %6 {offsets = [0, 256], sizes = [80, 256], strides = [1, 1]} : vector<80x1024xf32> to vector<80x256xf32>
    %9 = arith.addf %7, %8 : vector<80x256xf32>
    %10 = vector.extract_strided_slice %6 {offsets = [0, 512], sizes = [80, 256], strides = [1, 1]} : vector<80x1024xf32> to vector<80x256xf32>
    %11 = arith.addf %9, %10 : vector<80x256xf32>
    %12 = vector.extract_strided_slice %6 {offsets = [0, 768], sizes = [80, 256], strides = [1, 1]} : vector<80x1024xf32> to vector<80x256xf32>
    %13 = arith.addf %11, %12 : vector<80x256xf32>
    %c0_6 = arith.constant 0 : index
    %c0_7 = arith.constant 0 : index
    %14 = vector.load %arg5[%c0_6, %c0_7] : memref<8x80xf32, #tpu.memory_space<vmem>>, vector<8x80xf32>
    %cst_8 = arith.constant dense<0.000000e+00> : vector<8x256xf32>
    %15 = tpu.matmul %14, %13, %cst_8 {dimension_numbers = #tpu.dot_dimension_numbers<[1], [0], [0], [1], [0, 0, 1, 1], [], []>} : vector<8x80xf32>, vector<80x256xf32>, vector<8x256xf32> -> vector<8x256xf32>
    %16 = vector.extract_strided_slice %15 {offsets = [0, 0], sizes = [3, 256], strides = [1, 1]} : vector<8x256xf32> to vector<3x256xf32>
    %c0_9 = arith.constant 0 : index
    %c0_10 = arith.constant 0 : index
    %c0_11 = arith.constant 0 : index
    %17 = vector.load %arg6[%c0_9, %c0_10, %c0_11] : memref<1x3x256xf32, #tpu.memory_space<vmem>>, vector<1x3x256xf32>
    %18 = vector.shape_cast %17 : vector<1x3x256xf32> to vector<3x256xf32>
    %19 = vector.shape_cast %16 : vector<3x256xf32> to vector<1x3x256xf32>
    tpu.vector_store %arg6[%c0_9, %c0_10, %c0_11], %19 {strides = array<i32>} : memref<1x3x256xf32, #tpu.memory_space<vmem>>, vector<1x3x256xf32>,
    return
  }
  func.func @transform_0(%arg0: i32, %arg1: i32) -> (i32, i32, i32) {
    %c0_i32 = arith.constant 0 : i32
    %c0_i32_0 = arith.constant 0 : i32
    %c0_i32_1 = arith.constant 0 : i32
    return %arg1, %c0_i32, %c0_i32_0 : i32, i32, i32
  }
  func.func @transform_1(%arg0: i32, %arg1: i32) -> (i32, i32) {
    %c0_i32 = arith.constant 0 : i32
    %c0_i32_0 = arith.constant 0 : i32
    return %c0_i32, %arg0 : i32, i32
  }
  func.func @transform_2(%arg0: i32, %arg1: i32) -> (i32, i32) {
    %c0_i32 = arith.constant 0 : i32
    %c0_i32_0 = arith.constant 0 : i32
    return %c0_i32, %arg0 : i32, i32
  }
  func.func @transform_3(%arg0: i32, %arg1: i32) -> (i32, i32) {
    %c0_i32 = arith.constant 0 : i32
    %c0_i32_0 = arith.constant 0 : i32
    %c0_i32_1 = arith.constant 0 : i32
    return %c0_i32, %c0_i32_0 : i32, i32
  }
  func.func @transform_4(%arg0: i32, %arg1: i32) -> (i32, i32, i32) {
    %c0_i32 = arith.constant 0 : i32
    %c0_i32_0 = arith.constant 0 : i32
    return %arg1, %c0_i32, %arg0 : i32, i32, i32
  }
}

</mosaic_0001>

<llo_original>
// kernel: tpu_custom_call.1
$region0: #{tpu_custom_call.1}
  #allocation0 [shape = 'u32[]', space=smem, size = 0x4, offset = 0x4, fixed_abs, tag = 'smem constant byte address 0x4 - core index']
  #allocation1 [shape = 'u32[144,128]{1,0:T(1,128)}', space=vmem, size = 0x12000, scoped, tag = 'internal scratch']
  %s0 = inlined_call_operand.vmem [shape: f32[2,80,64], index: 0, kind: input, shape index: {}]
  %s1 = inlined_call_operand.vmem [shape: bf16[64,1024], index: 1, kind: input, shape index: {}]
  %s2 = inlined_call_operand.hbm [shape: f32[80,1024], index: 2, kind: input, shape index: {}]
  %s3 = inlined_call_operand.vmem [shape: f32[8,80], index: 3, kind: input, shape index: {}]
  %s4 = inlined_call_operand.vmem [shape: f32[2,3,256], index: 4, kind: output, shape index: {}]
  %s5 = sld [smem:[#allocation0]]
  $region53: #{tpu_custom_call.1} parent=0
    _
  %s7 = ssub.s32 1, %s5
  %s8 = scalar_select 0, %s7, %s5
  $region1: #{tpu_custom_call.1} parent=0
    #allocation2 [shape = 'u8[327680]{0}', space=vmem, size = 0x50000, scoped, tag = 'input window, operand 2, single buffered']
    #allocation3 [shape = 's32[2]{0}', space=sflag, size = 0x8, scoped, tag = 'scoped memory for tpu_custom_call.1']
    %9 = vsyncpa [#allocation3], 0
    loop: start=0, step=1, limit=4
    $region2: #{tpu_custom_call.1} parent=1 // loop_pre_header
      _
    $region3: #{tpu_custom_call.1} parent=1 // loop_header
      %s11 = sphi 0, %s15
      %p12 = scmp.ge.s32.totalorder %s11, 4
      %s18 = sphi 0, %s30
      %s19 = sphi 0, %s26
      %s20 = sphi 0, %s18
      %s21 = sphi 0, %s19
      %s22 = sphi 0, %s20
      %s23 = sphi 0, %s21
      %s33 = sphi 0, %s35
      %s36 = sphi 0, %s33
      %s37 = sphi 0, %s36
      %s53 = sphi 0, %s37
      %s59 = sphi 0, %s61
      %s62 = sphi 0, %s59
      %s63 = sphi 0, %s62
      %s79 = sphi 0, %s63
      %s85 = sphi 0, %s87
      %s88 = sphi 0, %s85
      %s89 = sphi 0, %s88
      %s105 = sphi 0, %s89
      %s109 = sphi 0, %s109
      %s111 = sphi 0, %s109
      %s112 = sphi 0, %s111
      %s126 = sphi 0, %s112
      %s134 = sphi 0, %s136
      %s137 = sphi 0, %s134
      %s138 = sphi 0, %s137
      %s154 = sphi 0, %s138
    $region4: #{tpu_custom_call.1} parent=1 // loop_header_branch
      %14 = sbr.rel (%p12) target = $region8
    $region5: #{tpu_custom_call.1} parent=1 // loop_body
      %s16 = ssub.s32 %s11, 1
      %s17 = ssub.s32 %s11, 2
      %s24 = sadd.s32 1, %s19
      %p25 = scmp.ge.s32.totalorder %s24, 2
      %s26 = scalar_select %p25, 0, %s24
      %s27 = sadd.s32 1, %s18
      %s28 = scalar_select %p25, %s27, %s18
      %p29 = scmp.ge.s32.totalorder %s28, 1
      %s30 = scalar_select %p29, 0, %s28
      %s31 = ssub.s32 %s19, %s26
      %p32 = scmp.eq.s32.totalorder %s31, 0
      %s34 = sadd.s32 %s33, 1
      %s35 = scalar_select %p32, %s33, %s34
      %p38 = pneg %p32
      %p39 = scmp.eq.s32.totalorder %s11, 1
      %p40 = por %p38, %p39
      %p41 = scmp.ne.s32.totalorder %s33, %s36
      %p42 = scmp.eq.s32.totalorder %s11, 0
      %p43 = por %p41, %p42
      %p44 = scmp.ne.s32.totalorder %s33, %s36
      %p45 = scmp.eq.s32.totalorder %s16, 1
      %p46 = por %p44, %p45
      %p47 = scmp.ne.s32.totalorder %s36, %s37
      %p48 = scmp.eq.s32.totalorder %s16, 0
      %p49 = por %p47, %p48
      %p50 = scmp.ne.s32.totalorder %s36, %s37
      %p51 = scmp.eq.s32.totalorder %s17, 1
      %p52 = por %p50, %p51
      %p54 = scmp.ne.s32.totalorder %s37, %s53
      %p55 = scmp.eq.s32.totalorder %s17, 0
      %p56 = por %p54, %p55
      %s57 = ssub.s32 %s18, %s30
      %p58 = scmp.eq.s32.totalorder %s57, 0
      %s60 = sadd.s32 %s59, 1
      %s61 = scalar_select %p58, %s59, %s60
      %p64 = pneg %p58
      %p65 = scmp.eq.s32.totalorder %s11, 1
      %p66 = por %p64, %p65
      %p67 = scmp.ne.s32.totalorder %s59, %s62
      %p68 = scmp.eq.s32.totalorder %s11, 0
      %p69 = por %p67, %p68
      %p70 = scmp.ne.s32.totalorder %s59, %s62
      %p71 = scmp.eq.s32.totalorder %s16, 1
      %p72 = por %p70, %p71
      %p73 = scmp.ne.s32.totalorder %s62, %s63
      %p74 = scmp.eq.s32.totalorder %s16, 0
      %p75 = por %p73, %p74
      %p76 = scmp.ne.s32.totalorder %s62, %s63
      %p77 = scmp.eq.s32.totalorder %s17, 1
      %p78 = por %p76, %p77
      %p80 = scmp.ne.s32.totalorder %s63, %s79
      %p81 = scmp.eq.s32.totalorder %s17, 0
      %p82 = por %p80, %p81
      %s83 = ssub.s32 %s18, %s30
      %p84 = scmp.eq.s32.totalorder %s83, 0
      %s86 = sadd.s32 %s85, 1
      %s87 = scalar_select %p84, %s85, %s86
      %p90 = pneg %p84
      %p91 = scmp.eq.s32.totalorder %s11, 1
      %p92 = por %p90, %p91
      %p93 = scmp.ne.s32.totalorder %s85, %s88
      %p94 = scmp.eq.s32.totalorder %s11, 0
      %p95 = por %p93, %p94
      %p96 = scmp.ne.s32.totalorder %s85, %s88
      %p97 = scmp.eq.s32.totalorder %s16, 1
      %p98 = por %p96, %p97
      %p99 = scmp.ne.s32.totalorder %s88, %s89
      %p100 = scmp.eq.s32.totalorder %s16, 0
      %p101 = por %p99, %p100
      %p102 = scmp.ne.s32.totalorder %s88, %s89
      %p103 = scmp.eq.s32.totalorder %s17, 1
      %p104 = por %p102, %p103
      %p106 = scmp.ne.s32.totalorder %s89, %s105
      %p107 = scmp.eq.s32.totalorder %s17, 0
      %p108 = por %p106, %p107
      %s110 = sadd.s32 %s109, 1
      %p113 = scmp.eq.s32.totalorder %s11, 1
      %p114 = scmp.ne.s32.totalorder %s109, %s111
      %p115 = scmp.eq.s32.totalorder %s11, 0
      %p116 = por %p114, %p115
      %p117 = scmp.ne.s32.totalorder %s109, %s111
      %p118 = scmp.eq.s32.totalorder %s16, 1
      %p119 = por %p117, %p118
      %p120 = scmp.ne.s32.totalorder %s111, %s112
      %p121 = scmp.eq.s32.totalorder %s16, 0
      %p122 = por %p120, %p121
      %p123 = scmp.ne.s32.totalorder %s111, %s112
      %p124 = scmp.eq.s32.totalorder %s17, 1
      %p125 = por %p123, %p124
      %p127 = scmp.ne.s32.totalorder %s112, %s126
      %p128 = scmp.eq.s32.totalorder %s17, 0
      %p129 = por %p127, %p128
      %s130 = ssub.s32 %s19, %s26
      %s131 = ssub.s32 %s18, %s30
      %s132 = sor.u32 %s130, %s131
      %p133 = scmp.eq.s32.totalorder %s132, 0
      %s135 = sadd.s32 %s134, 1
      %s136 = scalar_select %p133, %s134, %s135
      %p139 = pneg %p133
      %p140 = scmp.eq.s32.totalorder %s11, 1
      %p141 = por %p139, %p140
      %p142 = scmp.ne.s32.totalorder %s134, %s137
      %p143 = scmp.eq.s32.totalorder %s11, 0
      %p144 = por %p142, %p143
      %p145 = scmp.ne.s32.totalorder %s134, %s137
      %p146 = scmp.eq.s32.totalorder %s16, 1
      %p147 = por %p145, %p146
      %p148 = scmp.ne.s32.totalorder %s137, %s138
      %p149 = scmp.eq.s32.totalorder %s16, 0
      %p150 = por %p148, %p149
      %p151 = scmp.ne.s32.totalorder %s137, %s138
      %p152 = scmp.eq.s32.totalorder %s17, 1
      %p153 = por %p151, %p152
      %p155 = scmp.ne.s32.totalorder %s138, %s154
      %p156 = scmp.eq.s32.totalorder %s17, 0
      %p157 = por %p155, %p156
      %p158 = scmp.le.s32.totalorder 1, %s11
      %p159 = scmp.lt.s32.totalorder %s11, 3
      %p160 = pnand %p158, %p159
      %p161 = pneg %p160
      // Predicated region
      $region9: #{tpu_custom_call.1} parent=5 // pred_check
        _
      $region10: #{tpu_custom_call.1} parent=5 // pred_check_branch
        %163 = sbr.rel (%p160) target = $region12
      $region11: #{tpu_custom_call.1} parent=5 // pred_region
        %s164 = ssub.s32 %s11, 1
        // Predicated region
        $region13: #{tpu_custom_call.1} parent=11 // pred_check
          %p165 = pneg %p75
        $region14: #{tpu_custom_call.1} parent=11 // pred_check_branch
          %167 = sbr.rel (%p165) target = $region16
        $region15: #{tpu_custom_call.1} parent=11 // pred_region
          %s168 = smul.u32 8, %s20
          %p169 = scmp.lt.s32.totalorder %s168, 7
          %s170 = scalar_select %p169, %s168, 7
          %s171 = smul.addr %s170, 4
          %s172 = scalar_lea.vmem %s1, %s171
          %s173 = smul.u32 8, %s20
        $region16: #{tpu_custom_call.1} parent=11 // pred_fallthru
          _
        // Predicated region
        $region17: #{tpu_custom_call.1} parent=11 // pred_check
          %p174 = pneg %p101
        $region18: #{tpu_custom_call.1} parent=11 // pred_check_branch
          %176 = sbr.rel (%p174) target = $region20
        $region19: #{tpu_custom_call.1} parent=11 // pred_region
          %s177 = smul.u32 8, %s20
          %s179 = ssub.s32 10240, 10240
          %180 = vsyncadd [#allocation3], %s179
          %s181 = smul.addr %s177, 128
          %s182 = scalar_lea.hbm %s2, %s181
          %s183 = sshll.u32 [#allocation2], 4
          %s184 = int_to_ptr.vmem [resolvable:$true] %s183
          %189 = dma.hbm_to_vmem [thread:$0]  %s182, 10240, %s184, [#allocation3], 1024, 1024, 64
        $region20: #{tpu_custom_call.1} parent=11 // pred_fallthru
          _
        // Predicated region
        $region21: #{tpu_custom_call.1} parent=11 // pred_check
          %p190 = pneg %p122
        $region22: #{tpu_custom_call.1} parent=11 // pred_check_branch
          %192 = sbr.rel (%p190) target = $region24
        $region23: #{tpu_custom_call.1} parent=11 // pred_region
          _
        $region24: #{tpu_custom_call.1} parent=11 // pred_fallthru
          _
      $region12: #{tpu_custom_call.1} parent=5 // pred_fallthru
        _
      %p193 = scmp.lt.s32.totalorder %s11, 2
      // Predicated region
      $region25: #{tpu_custom_call.1} parent=5 // pred_check
        %p194 = pneg %p193
      $region26: #{tpu_custom_call.1} parent=5 // pred_check_branch
        %196 = sbr.rel (%p194) target = $region28
      $region27: #{tpu_custom_call.1} parent=5 // pred_region
        // Predicated region
        $region29: #{tpu_custom_call.1} parent=27 // pred_check
          %p197 = pneg %p43
        $region30: #{tpu_custom_call.1} parent=27 // pred_check_branch
          %199 = sbr.rel (%p197) target = $region32
        $region31: #{tpu_custom_call.1} parent=27 // pred_region
          %p200 = scmp.lt.s32.totalorder %s19, 1
          %s201 = scalar_select %p200, %s19, 1
          %s202 = smul.addr %s201, 10
          %s203 = smul.addr %s202, 8
          %s204 = scalar_lea.vmem %s0, %s203
        $region32: #{tpu_custom_call.1} parent=27 // pred_fallthru
          _
      $region28: #{tpu_custom_call.1} parent=5 // pred_fallthru
        _
      %p205 = scmp.le.s32.totalorder 1, %s11
      %p206 = scmp.lt.s32.totalorder %s11, 3
      %p207 = pnand %p205, %p206
      %p208 = pneg %p207
      // Predicated region
      $region33: #{tpu_custom_call.1} parent=5 // pred_check
        _
      $region34: #{tpu_custom_call.1} parent=5 // pred_check_branch
        %210 = sbr.rel (%p207) target = $region36
      $region35: #{tpu_custom_call.1} parent=5 // pred_region
        %s211 = ssub.s32 %s11, 1
        // Predicated region
        $region37: #{tpu_custom_call.1} parent=35 // pred_check
          %p212 = pneg %p101
        $region38: #{tpu_custom_call.1} parent=35 // pred_check_branch
          %214 = sbr.rel (%p212) target = $region40
        $region39: #{tpu_custom_call.1} parent=35 // pred_region
          %215 = dma.done [#allocation3], 10240
        $region40: #{tpu_custom_call.1} parent=35 // pred_fallthru
          _
        %p216 = scmp.lt.s32.totalorder %s21, 1
        %s217 = scalar_select %p216, %s21, 1
        %s218 = smul.addr %s217, 10
        %s219 = smul.addr %s218, 8
        %s220 = scalar_lea.vmem %s0, %s219
        %p221 = pneg %p49
        %p222 = pneg %p46
        %s223 = smul.u32 8, %s20
        %p224 = scmp.lt.s32.totalorder %s223, 7
        %s225 = scalar_select %p224, %s223, 7
        %s226 = smul.addr %s225, 4
        %s227 = scalar_lea.vmem %s1, %s226
        %p228 = pneg %p75
        %p229 = pneg %p72
        %p230 = pneg %p101
        %p231 = pneg %p98
        %p232 = pneg %p122
        %p233 = pneg %p119
        %p234 = pneg %p150
        %p235 = pneg %p147
        %s236 = smul.u32 2, %s20
        %p237 = scmp.lt.s32.totalorder %s21, 1
        %s238 = scalar_select %p237, %s21, 1
        %p239 = scmp.lt.s32.totalorder %s236, 1
        %s240 = scalar_select %p239, %s236, 1
        %s241 = smul.addr %s238, 2
        %s242 = sadd.s32 %s240, %s241
        %s243 = smul.addr %s242, 4
        %s244 = scalar_lea.vmem %s4, %s243
        %p245 = scmp.lt.s32.totalorder %s21, 1
        %s246 = scalar_select %p245, %s21, 1
        %s247 = smul.addr %s246, 10
        %s248 = smul.addr %s247, 8
        %s249 = scalar_lea.vmem %s0, %s248
        %s250 = smul.u32 8, %s20
        %p251 = scmp.lt.s32.totalorder %s250, 7
        %s252 = scalar_select %p251, %s250, 7
        %s253 = smul.addr %s252, 4
        %s254 = scalar_lea.vmem %s1, %s253
        %s255 = smul.u32 8, %s20
        %s256 = smul.u32 8, %s20
        %s257 = smul.u32 2, %s20
        %p258 = scmp.lt.s32.totalorder %s21, 1
        %s259 = scalar_select %p258, %s21, 1
        %p260 = scmp.lt.s32.totalorder %s257, 1
        %s261 = scalar_select %p260, %s257, 1
        %s262 = smul.addr %s259, 2
        %s263 = sadd.s32 %s261, %s262
        %s264 = smul.addr %s263, 4
        %s265 = scalar_lea.vmem %s4, %s264
        %s266 = smul.u32 2, %s20
        %v267 = vld [vmem:[%s254] sm:$0xff]
        %v268 = vld [vmem:[%s254 + $0x8] sm:$0xff]
        %v269 = vld [vmem:[%s254 + $0x10] sm:$0xff]
        %v270 = vld [vmem:[%s254 + $0x18] sm:$0xff]
        %v271 = vld [vmem:[%s254 + $0x20] sm:$0xff]
        %v272 = vld [vmem:[%s254 + $0x28] sm:$0xff]
        %v273 = vld [vmem:[%s254 + $0x30] sm:$0xff]
        %v274 = vld [vmem:[%s254 + $0x38] sm:$0xff]
        %v275 = vld [vmem:[%s254 + $0x40] sm:$0xff]
        %v276 = vld [vmem:[%s254 + $0x48] sm:$0xff]
        %v277 = vld [vmem:[%s254 + $0x50] sm:$0xff]
        %v278 = vld [vmem:[%s254 + $0x58] sm:$0xff]
        %v279 = vld [vmem:[%s254 + $0x60] sm:$0xff]
        %v280 = vld [vmem:[%s254 + $0x68] sm:$0xff]
        %v281 = vld [vmem:[%s254 + $0x70] sm:$0xff]
        %v282 = vld [vmem:[%s254 + $0x78] sm:$0xff]
        %v283 = vld [vmem:[%s254 + $0x80] sm:$0xff]
        %v284 = vld [vmem:[%s254 + $0x88] sm:$0xff]
        %v285 = vld [vmem:[%s254 + $0x90] sm:$0xff]
        %v286 = vld [vmem:[%s254 + $0x98] sm:$0xff]
        %v287 = vld [vmem:[%s254 + $0xa0] sm:$0xff]
        %v288 = vld [vmem:[%s254 + $0xa8] sm:$0xff]
        %v289 = vld [vmem:[%s254 + $0xb0] sm:$0xff]
        %v290 = vld [vmem:[%s254 + $0xb8] sm:$0xff]
        %v291 = vld [vmem:[%s254 + $0xc0] sm:$0xff]
        %v292 = vld [vmem:[%s254 + $0xc8] sm:$0xff]
        %v293 = vld [vmem:[%s254 + $0xd0] sm:$0xff]
        %v294 = vld [vmem:[%s254 + $0xd8] sm:$0xff]
        %v295 = vld [vmem:[%s254 + $0xe0] sm:$0xff]
        %v296 = vld [vmem:[%s254 + $0xe8] sm:$0xff]
        %v297 = vld [vmem:[%s254 + $0xf0] sm:$0xff]
        %v298 = vld [vmem:[%s254 + $0xf8] sm:$0xff]
        %v299 = vunpack.c.l.bf16 %v267
        %v300 = vunpack.c.h.bf16 %v267
        %v301 = vunpack.c.l.bf16 %v268
        %v302 = vunpack.c.h.bf16 %v268
        %v303 = vunpack.c.l.bf16 %v269
        %v304 = vunpack.c.h.bf16 %v269
        %v305 = vunpack.c.l.bf16 %v270
        %v306 = vunpack.c.h.bf16 %v270
        %v307 = vunpack.c.l.bf16 %v271
        %v308 = vunpack.c.h.bf16 %v271
        %v309 = vunpack.c.l.bf16 %v272
        %v310 = vunpack.c.h.bf16 %v272
        %v311 = vunpack.c.l.bf16 %v273
        %v312 = vunpack.c.h.bf16 %v273
        %v313 = vunpack.c.l.bf16 %v274
        %v314 = vunpack.c.h.bf16 %v274
        %v315 = vunpack.c.l.bf16 %v275
        %v316 = vunpack.c.h.bf16 %v275
        %v317 = vunpack.c.l.bf16 %v276
        %v318 = vunpack.c.h.bf16 %v276
        %v319 = vunpack.c.l.bf16 %v277
        %v320 = vunpack.c.h.bf16 %v277
        %v321 = vunpack.c.l.bf16 %v278
        %v322 = vunpack.c.h.bf16 %v278
        %v323 = vunpack.c.l.bf16 %v279
        %v324 = vunpack.c.h.bf16 %v279
        %v325 = vunpack.c.l.bf16 %v280
        %v326 = vunpack.c.h.bf16 %v280
        %v327 = vunpack.c.l.bf16 %v281
        %v328 = vunpack.c.h.bf16 %v281
        %v329 = vunpack.c.l.bf16 %v282
        %v330 = vunpack.c.h.bf16 %v282
        %v331 = vunpack.c.l.bf16 %v283
        %v332 = vunpack.c.h.bf16 %v283
        %v333 = vunpack.c.l.bf16 %v284
        %v334 = vunpack.c.h.bf16 %v284
        %v335 = vunpack.c.l.bf16 %v285
        %v336 = vunpack.c.h.bf16 %v285
        %v337 = vunpack.c.l.bf16 %v286
        %v338 = vunpack.c.h.bf16 %v286
        %v339 = vunpack.c.l.bf16 %v287
        %v340 = vunpack.c.h.bf16 %v287
        %v341 = vunpack.c.l.bf16 %v288
        %v342 = vunpack.c.h.bf16 %v288
        %v343 = vunpack.c.l.bf16 %v289
        %v344 = vunpack.c.h.bf16 %v289
        %v345 = vunpack.c.l.bf16 %v290
        %v346 = vunpack.c.h.bf16 %v290
        %v347 = vunpack.c.l.bf16 %v291
        %v348 = vunpack.c.h.bf16 %v291
        %v349 = vunpack.c.l.bf16 %v292
        %v350 = vunpack.c.h.bf16 %v292
        %v351 = vunpack.c.l.bf16 %v293
        %v352 = vunpack.c.h.bf16 %v293
        %v353 = vunpack.c.l.bf16 %v294
        %v354 = vunpack.c.h.bf16 %v294
        %v355 = vunpack.c.l.bf16 %v295
        %v356 = vunpack.c.h.bf16 %v295
        %v357 = vunpack.c.l.bf16 %v296
        %v358 = vunpack.c.h.bf16 %v296
        %v359 = vunpack.c.l.bf16 %v297
        %v360 = vunpack.c.h.bf16 %v297
        %v361 = vunpack.c.l.bf16 %v298
        %v362 = vunpack.c.h.bf16 %v298
        %v363 = vld [vmem:[%s249] sm:$0xff]
        %v364 = vld [vmem:[%s249 + $0x8] sm:$0xff]
        %v365 = vld [vmem:[%s249 + $0x10] sm:$0xff]
        %v366 = vld [vmem:[%s249 + $0x18] sm:$0xff]
        %v367 = vld [vmem:[%s249 + $0x20] sm:$0xff]
        %v368 = vld [vmem:[%s249 + $0x28] sm:$0xff]
        %v369 = vld [vmem:[%s249 + $0x30] sm:$0xff]
        %v370 = vld [vmem:[%s249 + $0x38] sm:$0xff]
        %v371 = vld [vmem:[%s249 + $0x40] sm:$0xff]
        %v372 = vld [vmem:[%s249 + $0x48] sm:$0xff]
        %vm373 = vcmask 523264
        %v375 = vsel %vm373, %v363, 0
        %v378 = vsel %vm373, %v364, 0
        %v381 = vsel %vm373, %v365, 0
        %v384 = vsel %vm373, %v366, 0
        %v387 = vsel %vm373, %v367, 0
        %v390 = vsel %vm373, %v368, 0
        %v393 = vsel %vm373, %v369, 0
        %v396 = vsel %vm373, %v370, 0
        %v399 = vsel %vm373, %v371, 0
        %v402 = vsel %vm373, %v372, 0
        %404 = vmatprep.subr.mxu0 0.0
        %405 = vmatpush1.msra.mxu0 0.0
        %406 = vmatprep.subr.mxu0 0.0
        %407 = vmatpush1.msra.mxu0 0.0
        %408 = vmatprep.subr.mxu0 0.0
        %409 = vmatpush1.msra.mxu0 0.0
        %410 = vmatprep.subr.mxu0 0.0
        %411 = vmatpush1.msra.mxu0 0.0
        %412 = vmatprep.subr.mxu0 0.0
        %413 = vmatpush1.msra.mxu0 0.0
        %414 = vmatprep.subr.mxu0 0.0
        %415 = vmatpush1.msra.mxu0 0.0
        %416 = vmatprep.subr.mxu0 0.0
        %417 = vmatpush1.msra.mxu0 0.0
        %418 = vmatprep.subr.mxu0 0.0
        %419 = vmatpush1.msra.mxu0 0.0
        %420 = vmatprep.subr.mxu0 %v356
        %421 = vmatpush1.msra.mxu0 %v355
        %422 = vmatprep.subr.mxu0 %v348
        %423 = vmatpush1.msra.mxu0 %v347
        %424 = vmatprep.subr.mxu0 %v340
        %425 = vmatpush1.msra.mxu0 %v339
        %426 = vmatprep.subr.mxu0 %v332
        %427 = vmatpush1.msra.mxu0 %v331
        %428 = vmatprep.subr.mxu0 %v324
        %429 = vmatpush1.msra.mxu0 %v323
        %430 = vmatprep.subr.mxu0 %v316
        %431 = vmatpush1.msra.mxu0 %v315
        %432 = vmatprep.subr.mxu0 %v308
        %433 = vmatpush1.msra.mxu0 %v307
        %434 = vmatprep.subr.mxu0 %v300
        %435 = vmatpush1.msra.mxu0 %v299
        %436 = vmatprep.subr.mxu0 0.0
        %437 = vmatpush2.msra.mxu0 0.0
        %438 = vmatprep.subr.mxu0 0.0
        %439 = vmatpush2.msra.mxu0 0.0
        %440 = vmatprep.subr.mxu0 0.0
        %441 = vmatpush2.msra.mxu0 0.0
        %442 = vmatprep.subr.mxu0 0.0
        %443 = vmatpush2.msra.mxu0 0.0
        %444 = vmatprep.subr.mxu0 0.0
        %445 = vmatpush2.msra.mxu0 0.0
        %446 = vmatprep.subr.mxu0 0.0
        %447 = vmatpush2.msra.mxu0 0.0
        %448 = vmatprep.subr.mxu0 0.0
        %449 = vmatpush2.msra.mxu0 0.0
        %450 = vmatprep.subr.mxu0 0.0
        %451 = vmatpush2.msra.mxu0 0.0
        %452 = vmatprep.subr.mxu0 0.0
        %453 = vmatpush2.msra.mxu0 0.0
        %454 = vmatprep.subr.mxu0 0.0
        %455 = vmatpush2.msra.mxu0 0.0
        %456 = vmatprep.subr.mxu0 0.0
        %457 = vmatpush2.msra.mxu0 0.0
        %458 = vmatprep.subr.mxu0 0.0
        %459 = vmatpush2.msra.mxu0 0.0
        %460 = vmatprep.subr.mxu0 0.0
        %461 = vmatpush2.msra.mxu0 0.0
        %462 = vmatprep.subr.mxu0 0.0
        %463 = vmatpush2.msra.mxu0 0.0
        %464 = vmatprep.subr.mxu0 0.0
        %465 = vmatpush2.msra.mxu0 0.0
        %466 = vmatprep.subr.mxu0 0.0
        %467 = vmatpush2.msra.mxu0 0.0
        %468 = vmatprep.mubr.f32.mxu0 0.0
        %469 = vmatmul.mubr.f32.gmra.mxu0 %v375
        %v470 = vpop.f32.mrf.mxu0
        %v471 = vadd.f32 0.0, %v470
        %v472 = vpop.f32.mrf.mxu0
        %v473 = vadd.f32 0.0, %v472
        %474 = vmatprep.mubr.f32.mxu0 0.0
        %475 = vmatmul.mubr.f32.gmra.mxu0 %v378
        %v476 = vpop.f32.mrf.mxu0
        %v477 = vadd.f32 0.0, %v476
        %v478 = vpop.f32.mrf.mxu0
        %v479 = vadd.f32 0.0, %v478
        %480 = vmatprep.mubr.f32.mxu0 0.0
        %481 = vmatmul.mubr.f32.gmra.mxu0 %v381
        %v482 = vpop.f32.mrf.mxu0
        %v483 = vadd.f32 0.0, %v482
        %v484 = vpop.f32.mrf.mxu0
        %v485 = vadd.f32 0.0, %v484
        %486 = vmatprep.mubr.f32.mxu0 0.0
        %487 = vmatmul.mubr.f32.gmra.mxu0 %v384
        %v488 = vpop.f32.mrf.mxu0
        %v489 = vadd.f32 0.0, %v488
        %v490 = vpop.f32.mrf.mxu0
        %v491 = vadd.f32 0.0, %v490
        %492 = vmatprep.mubr.f32.mxu0 0.0
        %493 = vmatmul.mubr.f32.gmra.mxu0 %v387
        %v494 = vpop.f32.mrf.mxu0
        %v495 = vadd.f32 0.0, %v494
        %v496 = vpop.f32.mrf.mxu0
        %v497 = vadd.f32 0.0, %v496
        %498 = vmatprep.mubr.f32.mxu0 0.0
        %499 = vmatmul.mubr.f32.gmra.mxu0 %v390
        %v500 = vpop.f32.mrf.mxu0
        %v501 = vadd.f32 0.0, %v500
        %v502 = vpop.f32.mrf.mxu0
        %v503 = vadd.f32 0.0, %v502
        %504 = vmatprep.mubr.f32.mxu0 0.0
        %505 = vmatmul.mubr.f32.gmra.mxu0 %v393
        %v506 = vpop.f32.mrf.mxu0
        %v507 = vadd.f32 0.0, %v506
        %v508 = vpop.f32.mrf.mxu0
        %v509 = vadd.f32 0.0, %v508
        %510 = vmatprep.mubr.f32.mxu0 0.0
        %511 = vmatmul.mubr.f32.gmra.mxu0 %v396
        %v512 = vpop.f32.mrf.mxu0
        %v513 = vadd.f32 0.0, %v512
        %v514 = vpop.f32.mrf.mxu0
        %v515 = vadd.f32 0.0, %v514
        %516 = vmatprep.mubr.f32.mxu0 0.0
        %517 = vmatmul.mubr.f32.gmra.mxu0 %v399
        %v518 = vpop.f32.mrf.mxu0
        %v519 = vadd.f32 0.0, %v518
        %v520 = vpop.f32.mrf.mxu0
        %v521 = vadd.f32 0.0, %v520
        %522 = vmatprep.mubr.f32.mxu0 0.0
        %523 = vmatmul.mubr.f32.gmra.mxu0 %v402
        %v524 = vpop.f32.mrf.mxu0
        %v525 = vadd.f32 0.0, %v524
        %v526 = vpop.f32.mrf.mxu0
        %v527 = vadd.f32 0.0, %v526
        %528 = vdwg.mxu0
        %529 = vmatprep.subr.mxu0 0.0
        %530 = vmatpush1.msra.mxu0 0.0
        %531 = vmatprep.subr.mxu0 0.0
        %532 = vmatpush1.msra.mxu0 0.0
        %533 = vmatprep.subr.mxu0 0.0
        %534 = vmatpush1.msra.mxu0 0.0
        %535 = vmatprep.subr.mxu0 0.0
        %536 = vmatpush1.msra.mxu0 0.0
        %537 = vmatprep.subr.mxu0 0.0
        %538 = vmatpush1.msra.mxu0 0.0
        %539 = vmatprep.subr.mxu0 0.0
        %540 = vmatpush1.msra.mxu0 0.0
        %541 = vmatprep.subr.mxu0 0.0
        %542 = vmatpush1.msra.mxu0 0.0
        %543 = vmatprep.subr.mxu0 0.0
        %544 = vmatpush1.msra.mxu0 0.0
        %545 = vmatprep.subr.mxu0 %v358
        %546 = vmatpush1.msra.mxu0 %v357
        %547 = vmatprep.subr.mxu0 %v350
        %548 = vmatpush1.msra.mxu0 %v349
        %549 = vmatprep.subr.mxu0 %v342
        %550 = vmatpush1.msra.mxu0 %v341
        %551 = vmatprep.subr.mxu0 %v334
        %552 = vmatpush1.msra.mxu0 %v333
        %553 = vmatprep.subr.mxu0 %v326
        %554 = vmatpush1.msra.mxu0 %v325
        %555 = vmatprep.subr.mxu0 %v318
        %556 = vmatpush1.msra.mxu0 %v317
        %557 = vmatprep.subr.mxu0 %v310
        %558 = vmatpush1.msra.mxu0 %v309
        %559 = vmatprep.subr.mxu0 %v302
        %560 = vmatpush1.msra.mxu0 %v301
        %561 = vmatprep.subr.mxu0 0.0
        %562 = vmatpush2.msra.mxu0 0.0
        %563 = vmatprep.subr.mxu0 0.0
        %564 = vmatpush2.msra.mxu0 0.0
        %565 = vmatprep.subr.mxu0 0.0
        %566 = vmatpush2.msra.mxu0 0.0
        %567 = vmatprep.subr.mxu0 0.0
        %568 = vmatpush2.msra.mxu0 0.0
        %569 = vmatprep.subr.mxu0 0.0
        %570 = vmatpush2.msra.mxu0 0.0
        %571 = vmatprep.subr.mxu0 0.0
        %572 = vmatpush2.msra.mxu0 0.0
        %573 = vmatprep.subr.mxu0 0.0
        %574 = vmatpush2.msra.mxu0 0.0
        %575 = vmatprep.subr.mxu0 0.0
        %576 = vmatpush2.msra.mxu0 0.0
        %577 = vmatprep.subr.mxu0 0.0
        %578 = vmatpush2.msra.mxu0 0.0
        %579 = vmatprep.subr.mxu0 0.0
        %580 = vmatpush2.msra.mxu0 0.0
        %581 = vmatprep.subr.mxu0 0.0
        %582 = vmatpush2.msra.mxu0 0.0
        %583 = vmatprep.subr.mxu0 0.0
        %584 = vmatpush2.msra.mxu0 0.0
        %585 = vmatprep.subr.mxu0 0.0
        %586 = vmatpush2.msra.mxu0 0.0
        %587 = vmatprep.subr.mxu0 0.0
        %588 = vmatpush2.msra.mxu0 0.0
        %589 = vmatprep.subr.mxu0 0.0
        %590 = vmatpush2.msra.mxu0 0.0
        %591 = vmatprep.subr.mxu0 0.0
        %592 = vmatpush2.msra.mxu0 0.0
        %593 = vmatprep.mubr.f32.mxu0 0.0
        %594 = vmatmul.mubr.f32.gmra.mxu0 %v375
        %v595 = vpop.f32.mrf.mxu0
        %v596 = vadd.f32 0.0, %v595
        %v597 = vpop.f32.mrf.mxu0
        %v598 = vadd.f32 0.0, %v597
        %599 = vmatprep.mubr.f32.mxu0 0.0
        %600 = vmatmul.mubr.f32.gmra.mxu0 %v378
        %v601 = vpop.f32.mrf.mxu0
        %v602 = vadd.f32 0.0, %v601
        %v603 = vpop.f32.mrf.mxu0
        %v604 = vadd.f32 0.0, %v603
        %605 = vmatprep.mubr.f32.mxu0 0.0
        %606 = vmatmul.mubr.f32.gmra.mxu0 %v381
        %v607 = vpop.f32.mrf.mxu0
        %v608 = vadd.f32 0.0, %v607
        %v609 = vpop.f32.mrf.mxu0
        %v610 = vadd.f32 0.0, %v609
        %611 = vmatprep.mubr.f32.mxu0 0.0
        %612 = vmatmul.mubr.f32.gmra.mxu0 %v384
        %v613 = vpop.f32.mrf.mxu0
        %v614 = vadd.f32 0.0, %v613
        %v615 = vpop.f32.mrf.mxu0
        %v616 = vadd.f32 0.0, %v615
        %617 = vmatprep.mubr.f32.mxu0 0.0
        %618 = vmatmul.mubr.f32.gmra.mxu0 %v387
        %v619 = vpop.f32.mrf.mxu0
        %v620 = vadd.f32 0.0, %v619
        %v621 = vpop.f32.mrf.mxu0
        %v622 = vadd.f32 0.0, %v621
        %623 = vmatprep.mubr.f32.mxu0 0.0
        %624 = vmatmul.mubr.f32.gmra.mxu0 %v390
        %v625 = vpop.f32.mrf.mxu0
        %v626 = vadd.f32 0.0, %v625
        %v627 = vpop.f32.mrf.mxu0
        %v628 = vadd.f32 0.0, %v627
        %629 = vmatprep.mubr.f32.mxu0 0.0
        %630 = vmatmul.mubr.f32.gmra.mxu0 %v393
        %v631 = vpop.f32.mrf.mxu0
        %v632 = vadd.f32 0.0, %v631
        %v633 = vpop.f32.mrf.mxu0
        %v634 = vadd.f32 0.0, %v633
        %635 = vmatprep.mubr.f32.mxu0 0.0
        %636 = vmatmul.mubr.f32.gmra.mxu0 %v396
        %v637 = vpop.f32.mrf.mxu0
        %v638 = vadd.f32 0.0, %v637
        %v639 = vpop.f32.mrf.mxu0
        %v640 = vadd.f32 0.0, %v639
        %641 = vmatprep.mubr.f32.mxu0 0.0
        %642 = vmatmul.mubr.f32.gmra.mxu0 %v399
        %v643 = vpop.f32.mrf.mxu0
        %v644 = vadd.f32 0.0, %v643
        %v645 = vpop.f32.mrf.mxu0
        %v646 = vadd.f32 0.0, %v645
        %647 = vmatprep.mubr.f32.mxu0 0.0
        %648 = vmatmul.mubr.f32.gmra.mxu0 %v402
        %v649 = vpop.f32.mrf.mxu0
        %v650 = vadd.f32 0.0, %v649
        %v651 = vpop.f32.mrf.mxu0
        %v652 = vadd.f32 0.0, %v651
        %653 = vdwg.mxu0
        %654 = vmatprep.subr.mxu0 0.0
        %655 = vmatpush1.msra.mxu0 0.0
        %656 = vmatprep.subr.mxu0 0.0
        %657 = vmatpush1.msra.mxu0 0.0
        %658 = vmatprep.subr.mxu0 0.0
        %659 = vmatpush1.msra.mxu0 0.0
        %660 = vmatprep.subr.mxu0 0.0
        %661 = vmatpush1.msra.mxu0 0.0
        %662 = vmatprep.subr.mxu0 0.0
        %663 = vmatpush1.msra.mxu0 0.0
        %664 = vmatprep.subr.mxu0 0.0
        %665 = vmatpush1.msra.mxu0 0.0
        %666 = vmatprep.subr.mxu0 0.0
        %667 = vmatpush1.msra.mxu0 0.0
        %668 = vmatprep.subr.mxu0 0.0
        %669 = vmatpush1.msra.mxu0 0.0
        %670 = vmatprep.subr.mxu0 %v360
        %671 = vmatpush1.msra.mxu0 %v359
        %672 = vmatprep.subr.mxu0 %v352
        %673 = vmatpush1.msra.mxu0 %v351
        %674 = vmatprep.subr.mxu0 %v344
        %675 = vmatpush1.msra.mxu0 %v343
        %676 = vmatprep.subr.mxu0 %v336
        %677 = vmatpush1.msra.mxu0 %v335
        %678 = vmatprep.subr.mxu0 %v328
        %679 = vmatpush1.msra.mxu0 %v327
        %680 = vmatprep.subr.mxu0 %v320
        %681 = vmatpush1.msra.mxu0 %v319
        %682 = vmatprep.subr.mxu0 %v312
        %683 = vmatpush1.msra.mxu0 %v311
        %684 = vmatprep.subr.mxu0 %v304
        %685 = vmatpush1.msra.mxu0 %v303
        %686 = vmatprep.subr.mxu0 0.0
        %687 = vmatpush2.msra.mxu0 0.0
        %688 = vmatprep.subr.mxu0 0.0
        %689 = vmatpush2.msra.mxu0 0.0
        %690 = vmatprep.subr.mxu0 0.0
        %691 = vmatpush2.msra.mxu0 0.0
        %692 = vmatprep.subr.mxu0 0.0
        %693 = vmatpush2.msra.mxu0 0.0
        %694 = vmatprep.subr.mxu0 0.0
        %695 = vmatpush2.msra.mxu0 0.0
        %696 = vmatprep.subr.mxu0 0.0
        %697 = vmatpush2.msra.mxu0 0.0
        %698 = vmatprep.subr.mxu0 0.0
        %699 = vmatpush2.msra.mxu0 0.0
        %700 = vmatprep.subr.mxu0 0.0
        %701 = vmatpush2.msra.mxu0 0.0
        %702 = vmatprep.subr.mxu0 0.0
        %703 = vmatpush2.msra.mxu0 0.0
        %704 = vmatprep.subr.mxu0 0.0
        %705 = vmatpush2.msra.mxu0 0.0
        %706 = vmatprep.subr.mxu0 0.0
        %707 = vmatpush2.msra.mxu0 0.0
        %708 = vmatprep.subr.mxu0 0.0
        %709 = vmatpush2.msra.mxu0 0.0
        %710 = vmatprep.subr.mxu0 0.0
        %711 = vmatpush2.msra.mxu0 0.0
        %712 = vmatprep.subr.mxu0 0.0
        %713 = vmatpush2.msra.mxu0 0.0
        %714 = vmatprep.subr.mxu0 0.0
        %715 = vmatpush2.msra.mxu0 0.0
        %716 = vmatprep.subr.mxu0 0.0
        %717 = vmatpush2.msra.mxu0 0.0
        %718 = vmatprep.mubr.f32.mxu0 0.0
        %719 = vmatmul.mubr.f32.gmra.mxu0 %v375
        %v720 = vpop.f32.mrf.mxu0
        %v721 = vadd.f32 0.0, %v720
        %v722 = vpop.f32.mrf.mxu0
        %v723 = vadd.f32 0.0, %v722
        %724 = vmatprep.mubr.f32.mxu0 0.0
        %725 = vmatmul.mubr.f32.gmra.mxu0 %v378
        %v726 = vpop.f32.mrf.mxu0
        %v727 = vadd.f32 0.0, %v726
        %v728 = vpop.f32.mrf.mxu0
        %v729 = vadd.f32 0.0, %v728
        %730 = vmatprep.mubr.f32.mxu0 0.0
        %731 = vmatmul.mubr.f32.gmra.mxu0 %v381
        %v732 = vpop.f32.mrf.mxu0
        %v733 = vadd.f32 0.0, %v732
        %v734 = vpop.f32.mrf.mxu0
        %v735 = vadd.f32 0.0, %v734
        %736 = vmatprep.mubr.f32.mxu0 0.0
        %737 = vmatmul.mubr.f32.gmra.mxu0 %v384
        %v738 = vpop.f32.mrf.mxu0
        %v739 = vadd.f32 0.0, %v738
        %v740 = vpop.f32.mrf.mxu0
        %v741 = vadd.f32 0.0, %v740
        %742 = vmatprep.mubr.f32.mxu0 0.0
        %743 = vmatmul.mubr.f32.gmra.mxu0 %v387
        %v744 = vpop.f32.mrf.mxu0
        %v745 = vadd.f32 0.0, %v744
        %v746 = vpop.f32.mrf.mxu0
        %v747 = vadd.f32 0.0, %v746
        %748 = vmatprep.mubr.f32.mxu0 0.0
        %749 = vmatmul.mubr.f32.gmra.mxu0 %v390
        %v750 = vpop.f32.mrf.mxu0
        %v751 = vadd.f32 0.0, %v750
        %v752 = vpop.f32.mrf.mxu0
        %v753 = vadd.f32 0.0, %v752
        %754 = vmatprep.mubr.f32.mxu0 0.0
        %755 = vmatmul.mubr.f32.gmra.mxu0 %v393
        %v756 = vpop.f32.mrf.mxu0
        %v757 = vadd.f32 0.0, %v756
        %v758 = vpop.f32.mrf.mxu0
        %v759 = vadd.f32 0.0, %v758
        %760 = vmatprep.mubr.f32.mxu0 0.0
        %761 = vmatmul.mubr.f32.gmra.mxu0 %v396
        %v762 = vpop.f32.mrf.mxu0
        %v763 = vadd.f32 0.0, %v762
        %v764 = vpop.f32.mrf.mxu0
        %v765 = vadd.f32 0.0, %v764
        %766 = vmatprep.mubr.f32.mxu0 0.0
        %767 = vmatmul.mubr.f32.gmra.mxu0 %v399
        %v768 = vpop.f32.mrf.mxu0
        %v769 = vadd.f32 0.0, %v768
        %v770 = vpop.f32.mrf.mxu0
        %v771 = vadd.f32 0.0, %v770
        %772 = vmatprep.mubr.f32.mxu0 0.0
        %773 = vmatmul.mubr.f32.gmra.mxu0 %v402
        %v774 = vpop.f32.mrf.mxu0
        %v775 = vadd.f32 0.0, %v774
        %v776 = vpop.f32.mrf.mxu0
        %v777 = vadd.f32 0.0, %v776
        %778 = vdwg.mxu0
        %779 = vmatprep.subr.mxu0 0.0
        %780 = vmatpush1.msra.mxu0 0.0
        %781 = vmatprep.subr.mxu0 0.0
        %782 = vmatpush1.msra.mxu0 0.0
        %783 = vmatprep.subr.mxu0 0.0
        %784 = vmatpush1.msra.mxu0 0.0
        %785 = vmatprep.subr.mxu0 0.0
        %786 = vmatpush1.msra.mxu0 0.0
        %787 = vmatprep.subr.mxu0 0.0
        %788 = vmatpush1.msra.mxu0 0.0
        %789 = vmatprep.subr.mxu0 0.0
        %790 = vmatpush1.msra.mxu0 0.0
        %791 = vmatprep.subr.mxu0 0.0
        %792 = vmatpush1.msra.mxu0 0.0
        %793 = vmatprep.subr.mxu0 0.0
        %794 = vmatpush1.msra.mxu0 0.0
        %795 = vmatprep.subr.mxu0 %v362
        %796 = vmatpush1.msra.mxu0 %v361
        %797 = vmatprep.subr.mxu0 %v354
        %798 = vmatpush1.msra.mxu0 %v353
        %799 = vmatprep.subr.mxu0 %v346
        %800 = vmatpush1.msra.mxu0 %v345
        %801 = vmatprep.subr.mxu0 %v338
        %802 = vmatpush1.msra.mxu0 %v337
        %803 = vmatprep.subr.mxu0 %v330
        %804 = vmatpush1.msra.mxu0 %v329
        %805 = vmatprep.subr.mxu0 %v322
        %806 = vmatpush1.msra.mxu0 %v321
        %807 = vmatprep.subr.mxu0 %v314
        %808 = vmatpush1.msra.mxu0 %v313
        %809 = vmatprep.subr.mxu0 %v306
        %810 = vmatpush1.msra.mxu0 %v305
        %811 = vmatprep.subr.mxu0 0.0
        %812 = vmatpush2.msra.mxu0 0.0
        %813 = vmatprep.subr.mxu0 0.0
        %814 = vmatpush2.msra.mxu0 0.0
        %815 = vmatprep.subr.mxu0 0.0
        %816 = vmatpush2.msra.mxu0 0.0
        %817 = vmatprep.subr.mxu0 0.0
        %818 = vmatpush2.msra.mxu0 0.0
        %819 = vmatprep.subr.mxu0 0.0
        %820 = vmatpush2.msra.mxu0 0.0
        %821 = vmatprep.subr.mxu0 0.0
        %822 = vmatpush2.msra.mxu0 0.0
        %823 = vmatprep.subr.mxu0 0.0
        %824 = vmatpush2.msra.mxu0 0.0
        %825 = vmatprep.subr.mxu0 0.0
        %826 = vmatpush2.msra.mxu0 0.0
        %827 = vmatprep.subr.mxu0 0.0
        %828 = vmatpush2.msra.mxu0 0.0
        %829 = vmatprep.subr.mxu0 0.0
        %830 = vmatpush2.msra.mxu0 0.0
        %831 = vmatprep.subr.mxu0 0.0
        %832 = vmatpush2.msra.mxu0 0.0
        %833 = vmatprep.subr.mxu0 0.0
        %834 = vmatpush2.msra.mxu0 0.0
        %835 = vmatprep.subr.mxu0 0.0
        %836 = vmatpush2.msra.mxu0 0.0
        %837 = vmatprep.subr.mxu0 0.0
        %838 = vmatpush2.msra.mxu0 0.0
        %839 = vmatprep.subr.mxu0 0.0
        %840 = vmatpush2.msra.mxu0 0.0
        %841 = vmatprep.subr.mxu0 0.0
        %842 = vmatpush2.msra.mxu0 0.0
        %843 = vmatprep.mubr.f32.mxu0 0.0
        %844 = vmatmul.mubr.f32.gmra.mxu0 %v375
        %v845 = vpop.f32.mrf.mxu0
        %v846 = vadd.f32 0.0, %v845
        %v847 = vpop.f32.mrf.mxu0
        %v848 = vadd.f32 0.0, %v847
        %849 = vmatprep.mubr.f32.mxu0 0.0
        %850 = vmatmul.mubr.f32.gmra.mxu0 %v378
        %v851 = vpop.f32.mrf.mxu0
        %v852 = vadd.f32 0.0, %v851
        %v853 = vpop.f32.mrf.mxu0
        %v854 = vadd.f32 0.0, %v853
        %855 = vmatprep.mubr.f32.mxu0 0.0
        %856 = vmatmul.mubr.f32.gmra.mxu0 %v381
        %v857 = vpop.f32.mrf.mxu0
        %v858 = vadd.f32 0.0, %v857
        %v859 = vpop.f32.mrf.mxu0
        %v860 = vadd.f32 0.0, %v859
        %861 = vmatprep.mubr.f32.mxu0 0.0
        %862 = vmatmul.mubr.f32.gmra.mxu0 %v384
        %v863 = vpop.f32.mrf.mxu0
        %v864 = vadd.f32 0.0, %v863
        %v865 = vpop.f32.mrf.mxu0
        %v866 = vadd.f32 0.0, %v865
        %867 = vmatprep.mubr.f32.mxu0 0.0
        %868 = vmatmul.mubr.f32.gmra.mxu0 %v387
        %v869 = vpop.f32.mrf.mxu0
        %v870 = vadd.f32 0.0, %v869
        %v871 = vpop.f32.mrf.mxu0
        %v872 = vadd.f32 0.0, %v871
        %873 = vmatprep.mubr.f32.mxu0 0.0
        %874 = vmatmul.mubr.f32.gmra.mxu0 %v390
        %v875 = vpop.f32.mrf.mxu0
        %v876 = vadd.f32 0.0, %v875
        %v877 = vpop.f32.mrf.mxu0
        %v878 = vadd.f32 0.0, %v877
        %879 = vmatprep.mubr.f32.mxu0 0.0
        %880 = vmatmul.mubr.f32.gmra.mxu0 %v393
        %v881 = vpop.f32.mrf.mxu0
        %v882 = vadd.f32 0.0, %v881
        %v883 = vpop.f32.mrf.mxu0
        %v884 = vadd.f32 0.0, %v883
        %885 = vmatprep.mubr.f32.mxu0 0.0
        %886 = vmatmul.mubr.f32.gmra.mxu0 %v396
        %v887 = vpop.f32.mrf.mxu0
        %v888 = vadd.f32 0.0, %v887
        %v889 = vpop.f32.mrf.mxu0
        %v890 = vadd.f32 0.0, %v889
        %891 = vmatprep.mubr.f32.mxu0 0.0
        %892 = vmatmul.mubr.f32.gmra.mxu0 %v399
        %v893 = vpop.f32.mrf.mxu0
        %v894 = vadd.f32 0.0, %v893
        %v895 = vpop.f32.mrf.mxu0
        %v896 = vadd.f32 0.0, %v895
        %897 = vmatprep.mubr.f32.mxu0 0.0
        %898 = vmatmul.mubr.f32.gmra.mxu0 %v402
        %v899 = vpop.f32.mrf.mxu0
        %v900 = vadd.f32 0.0, %v899
        %v901 = vpop.f32.mrf.mxu0
        %v902 = vadd.f32 0.0, %v901
        %903 = vdwg.mxu0
        %v904 = vld [vmem:[#allocation2] sm:$0xff]
        %v905 = vld [vmem:[#allocation2 + $0x8] sm:$0xff]
        %v906 = vld [vmem:[#allocation2 + $0x10] sm:$0xff]
        %v907 = vld [vmem:[#allocation2 + $0x18] sm:$0xff]
        %v908 = vld [vmem:[#allocation2 + $0x20] sm:$0xff]
        %v909 = vld [vmem:[#allocation2 + $0x28] sm:$0xff]
        %v910 = vld [vmem:[#allocation2 + $0x30] sm:$0xff]
        %v911 = vld [vmem:[#allocation2 + $0x38] sm:$0xff]
        %v912 = vld [vmem:[#allocation2 + $0x40] sm:$0xff]
        %v913 = vld [vmem:[#allocation2 + $0x48] sm:$0xff]
        %v914 = vld [vmem:[#allocation2 + $0x50] sm:$0xff]
        %v915 = vld [vmem:[#allocation2 + $0x58] sm:$0xff]
        %v916 = vld [vmem:[#allocation2 + $0x60] sm:$0xff]
        %v917 = vld [vmem:[#allocation2 + $0x68] sm:$0xff]
        %v918 = vld [vmem:[#allocation2 + $0x70] sm:$0xff]
        %v919 = vld [vmem:[#allocation2 + $0x78] sm:$0xff]
        %v920 = vld [vmem:[#allocation2 + $0x80] sm:$0xff]
        %v921 = vld [vmem:[#allocation2 + $0x88] sm:$0xff]
        %v922 = vld [vmem:[#allocation2 + $0x90] sm:$0xff]
        %v923 = vld [vmem:[#allocation2 + $0x98] sm:$0xff]
        %v924 = vld [vmem:[#allocation2 + $0xa0] sm:$0xff]
        %v925 = vld [vmem:[#allocation2 + $0xa8] sm:$0xff]
        %v926 = vld [vmem:[#allocation2 + $0xb0] sm:$0xff]
        %v927 = vld [vmem:[#allocation2 + $0xb8] sm:$0xff]
        %v928 = vld [vmem:[#allocation2 + $0xc0] sm:$0xff]
        %v929 = vld [vmem:[#allocation2 + $0xc8] sm:$0xff]
        %v930 = vld [vmem:[#allocation2 + $0xd0] sm:$0xff]
        %v931 = vld [vmem:[#allocation2 + $0xd8] sm:$0xff]
        %v932 = vld [vmem:[#allocation2 + $0xe0] sm:$0xff]
        %v933 = vld [vmem:[#allocation2 + $0xe8] sm:$0xff]
        %v934 = vld [vmem:[#allocation2 + $0xf0] sm:$0xff]
        %v935 = vld [vmem:[#allocation2 + $0xf8] sm:$0xff]
        %v936 = vld [vmem:[#allocation2 + $0x100] sm:$0xff]
        %v937 = vld [vmem:[#allocation2 + $0x108] sm:$0xff]
        %v938 = vld [vmem:[#allocation2 + $0x110] sm:$0xff]
        %v939 = vld [vmem:[#allocation2 + $0x118] sm:$0xff]
        %v940 = vld [vmem:[#allocation2 + $0x120] sm:$0xff]
        %v941 = vld [vmem:[#allocation2 + $0x128] sm:$0xff]
        %v942 = vld [vmem:[#allocation2 + $0x130] sm:$0xff]
        %v943 = vld [vmem:[#allocation2 + $0x138] sm:$0xff]
        %v944 = vld [vmem:[#allocation2 + $0x140] sm:$0xff]
        %v945 = vld [vmem:[#allocation2 + $0x148] sm:$0xff]
        %v946 = vld [vmem:[#allocation2 + $0x150] sm:$0xff]
        %v947 = vld [vmem:[#allocation2 + $0x158] sm:$0xff]
        %v948 = vld [vmem:[#allocation2 + $0x160] sm:$0xff]
        %v949 = vld [vmem:[#allocation2 + $0x168] sm:$0xff]
        %v950 = vld [vmem:[#allocation2 + $0x170] sm:$0xff]
        %v951 = vld [vmem:[#allocation2 + $0x178] sm:$0xff]
        %v952 = vld [vmem:[#allocation2 + $0x180] sm:$0xff]
        %v953 = vld [vmem:[#allocation2 + $0x188] sm:$0xff]
        %v954 = vld [vmem:[#allocation2 + $0x190] sm:$0xff]
        %v955 = vld [vmem:[#allocation2 + $0x198] sm:$0xff]
        %v956 = vld [vmem:[#allocation2 + $0x1a0] sm:$0xff]
        %v957 = vld [vmem:[#allocation2 + $0x1a8] sm:$0xff]
        %v958 = vld [vmem:[#allocation2 + $0x1b0] sm:$0xff]
        %v959 = vld [vmem:[#allocation2 + $0x1b8] sm:$0xff]
        %v960 = vld [vmem:[#allocation2 + $0x1c0] sm:$0xff]
        %v961 = vld [vmem:[#allocation2 + $0x1c8] sm:$0xff]
        %v962 = vld [vmem:[#allocation2 + $0x1d0] sm:$0xff]
        %v963 = vld [vmem:[#allocation2 + $0x1d8] sm:$0xff]
        %v964 = vld [vmem:[#allocation2 + $0x1e0] sm:$0xff]
        %v965 = vld [vmem:[#allocation2 + $0x1e8] sm:$0xff]
        %v966 = vld [vmem:[#allocation2 + $0x1f0] sm:$0xff]
        %v967 = vld [vmem:[#allocation2 + $0x1f8] sm:$0xff]
        %v968 = vld [vmem:[#allocation2 + $0x200] sm:$0xff]
        %v969 = vld [vmem:[#allocation2 + $0x208] sm:$0xff]
        %v970 = vld [vmem:[#allocation2 + $0x210] sm:$0xff]
        %v971 = vld [vmem:[#allocation2 + $0x218] sm:$0xff]
        %v972 = vld [vmem:[#allocation2 + $0x220] sm:$0xff]
        %v973 = vld [vmem:[#allocation2 + $0x228] sm:$0xff]
        %v974 = vld [vmem:[#allocation2 + $0x230] sm:$0xff]
        %v975 = vld [vmem:[#allocation2 + $0x238] sm:$0xff]
        %v976 = vld [vmem:[#allocation2 + $0x240] sm:$0xff]
        %v977 = vld [vmem:[#allocation2 + $0x248] sm:$0xff]
        %v978 = vld [vmem:[#allocation2 + $0x250] sm:$0xff]
        %v979 = vld [vmem:[#allocation2 + $0x258] sm:$0xff]
        %v980 = vld [vmem:[#allocation2 + $0x260] sm:$0xff]
        %v981 = vld [vmem:[#allocation2 + $0x268] sm:$0xff]
        %v982 = vld [vmem:[#allocation2 + $0x270] sm:$0xff]
        %v983 = vld [vmem:[#allocation2 + $0x278] sm:$0xff]
        %v984 = vmul.f32 %v471, %v904
        %v985 = vmul.f32 %v473, %v905
        %v986 = vmul.f32 %v596, %v906
        %v987 = vmul.f32 %v598, %v907
        %v988 = vmul.f32 %v721, %v908
        %v989 = vmul.f32 %v723, %v909
        %v990 = vmul.f32 %v846, %v910
        %v991 = vmul.f32 %v848, %v911
        %v992 = vmul.f32 %v477, %v912
        %v993 = vmul.f32 %v479, %v913
        %v994 = vmul.f32 %v602, %v914
        %v995 = vmul.f32 %v604, %v915
        %v996 = vmul.f32 %v727, %v916
        %v997 = vmul.f32 %v729, %v917
        %v998 = vmul.f32 %v852, %v918
        %v999 = vmul.f32 %v854, %v919
        %v1000 = vmul.f32 %v483, %v920
        %v1001 = vmul.f32 %v485, %v921
        %v1002 = vmul.f32 %v608, %v922
        %v1003 = vmul.f32 %v610, %v923
        %v1004 = vmul.f32 %v733, %v924
        %v1005 = vmul.f32 %v735, %v925
        %v1006 = vmul.f32 %v858, %v926
        %v1007 = vmul.f32 %v860, %v927
        %v1008 = vmul.f32 %v489, %v928
        %v1009 = vmul.f32 %v491, %v929
        %v1010 = vmul.f32 %v614, %v930
        %v1011 = vmul.f32 %v616, %v931
        %v1012 = vmul.f32 %v739, %v932
        %v1013 = vmul.f32 %v741, %v933
        %v1014 = vmul.f32 %v864, %v934
        %v1015 = vmul.f32 %v866, %v935
        %v1016 = vmul.f32 %v495, %v936
        %v1017 = vmul.f32 %v497, %v937
        %v1018 = vmul.f32 %v620, %v938
        %v1019 = vmul.f32 %v622, %v939
        %v1020 = vmul.f32 %v745, %v940
        %v1021 = vmul.f32 %v747, %v941
        %v1022 = vmul.f32 %v870, %v942
        %v1023 = vmul.f32 %v872, %v943
        %v1024 = vmul.f32 %v501, %v944
        %v1025 = vmul.f32 %v503, %v945
        %v1026 = vmul.f32 %v626, %v946
        %v1027 = vmul.f32 %v628, %v947
        %v1028 = vmul.f32 %v751, %v948
        %v1029 = vmul.f32 %v753, %v949
        %v1030 = vmul.f32 %v876, %v950
        %v1031 = vmul.f32 %v878, %v951
        %v1032 = vmul.f32 %v507, %v952
        %v1033 = vmul.f32 %v509, %v953
        %v1034 = vmul.f32 %v632, %v954
        %v1035 = vmul.f32 %v634, %v955
        %v1036 = vmul.f32 %v757, %v956
        %v1037 = vmul.f32 %v759, %v957
        %v1038 = vmul.f32 %v882, %v958
        %v1039 = vmul.f32 %v884, %v959
        %v1040 = vmul.f32 %v513, %v960
        %v1041 = vmul.f32 %v515, %v961
        %v1042 = vmul.f32 %v638, %v962
        %v1043 = vmul.f32 %v640, %v963
        %v1044 = vmul.f32 %v763, %v964
        %v1045 = vmul.f32 %v765, %v965
        %v1046 = vmul.f32 %v888, %v966
        %v1047 = vmul.f32 %v890, %v967
        %v1048 = vmul.f32 %v519, %v968
        %v1049 = vmul.f32 %v521, %v969
        %v1050 = vmul.f32 %v644, %v970
        %v1051 = vmul.f32 %v646, %v971
        %v1052 = vmul.f32 %v769, %v972
        %v1053 = vmul.f32 %v771, %v973
        %v1054 = vmul.f32 %v894, %v974
        %v1055 = vmul.f32 %v896, %v975
        %v1056 = vmul.f32 %v525, %v976
        %v1057 = vmul.f32 %v527, %v977
        %v1058 = vmul.f32 %v650, %v978
        %v1059 = vmul.f32 %v652, %v979
        %v1060 = vmul.f32 %v775, %v980
        %v1061 = vmul.f32 %v777, %v981
        %v1062 = vmul.f32 %v900, %v982
        %v1063 = vmul.f32 %v902, %v983
        %v1064 = vadd.f32 %v984, %v986
        %v1065 = vadd.f32 %v985, %v987
        %v1066 = vadd.f32 %v992, %v994
        %v1067 = vadd.f32 %v993, %v995
        %v1068 = vadd.f32 %v1000, %v1002
        %v1069 = vadd.f32 %v1001, %v1003
        %v1070 = vadd.f32 %v1008, %v1010
        %v1071 = vadd.f32 %v1009, %v1011
        %v1072 = vadd.f32 %v1016, %v1018
        %v1073 = vadd.f32 %v1017, %v1019
        %v1074 = vadd.f32 %v1024, %v1026
        %v1075 = vadd.f32 %v1025, %v1027
        %v1076 = vadd.f32 %v1032, %v1034
        %v1077 = vadd.f32 %v1033, %v1035
        %v1078 = vadd.f32 %v1040, %v1042
        %v1079 = vadd.f32 %v1041, %v1043
        %v1080 = vadd.f32 %v1048, %v1050
        %v1081 = vadd.f32 %v1049, %v1051
        %v1082 = vadd.f32 %v1056, %v1058
        %v1083 = vadd.f32 %v1057, %v1059
        %v1084 = vadd.f32 %v1064, %v988
        %v1085 = vadd.f32 %v1065, %v989
        %v1086 = vadd.f32 %v1066, %v996
        %v1087 = vadd.f32 %v1067, %v997
        %v1088 = vadd.f32 %v1068, %v1004
        %v1089 = vadd.f32 %v1069, %v1005
        %v1090 = vadd.f32 %v1070, %v1012
        %v1091 = vadd.f32 %v1071, %v1013
        %v1092 = vadd.f32 %v1072, %v1020
        %v1093 = vadd.f32 %v1073, %v1021
        %v1094 = vadd.f32 %v1074, %v1028
        %v1095 = vadd.f32 %v1075, %v1029
        %v1096 = vadd.f32 %v1076, %v1036
        %v1097 = vadd.f32 %v1077, %v1037
        %v1098 = vadd.f32 %v1078, %v1044
        %v1099 = vadd.f32 %v1079, %v1045
        %v1100 = vadd.f32 %v1080, %v1052
        %v1101 = vadd.f32 %v1081, %v1053
        %v1102 = vadd.f32 %v1082, %v1060
        %v1103 = vadd.f32 %v1083, %v1061
        %v1104 = vadd.f32 %v1084, %v990
        %v1105 = vadd.f32 %v1085, %v991
        %v1106 = vadd.f32 %v1086, %v998
        %v1107 = vadd.f32 %v1087, %v999
        %v1108 = vadd.f32 %v1088, %v1006
        %v1109 = vadd.f32 %v1089, %v1007
        %v1110 = vadd.f32 %v1090, %v1014
        %v1111 = vadd.f32 %v1091, %v1015
        %v1112 = vadd.f32 %v1092, %v1022
        %v1113 = vadd.f32 %v1093, %v1023
        %v1114 = vadd.f32 %v1094, %v1030
        %v1115 = vadd.f32 %v1095, %v1031
        %v1116 = vadd.f32 %v1096, %v1038
        %v1117 = vadd.f32 %v1097, %v1039
        %v1118 = vadd.f32 %v1098, %v1046
        %v1119 = vadd.f32 %v1099, %v1047
        %v1120 = vadd.f32 %v1100, %v1054
        %v1121 = vadd.f32 %v1101, %v1055
        %v1122 = vadd.f32 %v1102, %v1062
        %v1123 = vadd.f32 %v1103, %v1063
        %v1124 = vld [vmem:[%s3] sm:$0xff]
        %vm1125 = vcmask 654336
        %v1127 = vsel %vm1125, %v1124, 0
        %1129 = vmatprep.subr.mxu0 0.0
        %1130 = vmatpush1.msra.mxu0 0.0
        %1131 = vmatprep.subr.mxu0 0.0
        %1132 = vmatpush1.msra.mxu0 0.0
        %1133 = vmatprep.subr.mxu0 0.0
        %1134 = vmatpush1.msra.mxu0 0.0
        %1135 = vmatprep.subr.mxu0 0.0
        %1136 = vmatpush1.msra.mxu0 0.0
        %1137 = vmatprep.subr.mxu0 0.0
        %1138 = vmatpush1.msra.mxu0 0.0
        %1139 = vmatprep.subr.mxu0 0.0
        %1140 = vmatpush1.msra.mxu0 0.0
        %1141 = vmatprep.subr.mxu0 %v1123
        %1142 = vmatpush1.msra.mxu0 %v1122
        %1143 = vmatprep.subr.mxu0 %v1121
        %1144 = vmatpush1.msra.mxu0 %v1120
        %1145 = vmatprep.subr.mxu0 %v1119
        %1146 = vmatpush1.msra.mxu0 %v1118
        %1147 = vmatprep.subr.mxu0 %v1117
        %1148 = vmatpush1.msra.mxu0 %v1116
        %1149 = vmatprep.subr.mxu0 %v1115
        %1150 = vmatpush1.msra.mxu0 %v1114
        %1151 = vmatprep.subr.mxu0 %v1113
        %1152 = vmatpush1.msra.mxu0 %v1112
        %1153 = vmatprep.subr.mxu0 %v1111
        %1154 = vmatpush1.msra.mxu0 %v1110
        %1155 = vmatprep.subr.mxu0 %v1109
        %1156 = vmatpush1.msra.mxu0 %v1108
        %1157 = vmatprep.subr.mxu0 %v1107
        %1158 = vmatpush1.msra.mxu0 %v1106
        %1159 = vmatprep.subr.mxu0 %v1105
        %1160 = vmatpush1.msra.mxu0 %v1104
        %1161 = vmatprep.subr.mxu0 0.0
        %1162 = vmatpush2.msra.mxu0 0.0
        %1163 = vmatprep.subr.mxu0 0.0
        %1164 = vmatpush2.msra.mxu0 0.0
        %1165 = vmatprep.subr.mxu0 0.0
        %1166 = vmatpush2.msra.mxu0 0.0
        %1167 = vmatprep.subr.mxu0 0.0
        %1168 = vmatpush2.msra.mxu0 0.0
        %1169 = vmatprep.subr.mxu0 0.0
        %1170 = vmatpush2.msra.mxu0 0.0
        %1171 = vmatprep.subr.mxu0 0.0
        %1172 = vmatpush2.msra.mxu0 0.0
        %1173 = vmatprep.subr.mxu0 0.0
        %1174 = vmatpush2.msra.mxu0 0.0
        %1175 = vmatprep.subr.mxu0 0.0
        %1176 = vmatpush2.msra.mxu0 0.0
        %1177 = vmatprep.subr.mxu0 0.0
        %1178 = vmatpush2.msra.mxu0 0.0
        %1179 = vmatprep.subr.mxu0 0.0
        %1180 = vmatpush2.msra.mxu0 0.0
        %1181 = vmatprep.subr.mxu0 0.0
        %1182 = vmatpush2.msra.mxu0 0.0
        %1183 = vmatprep.subr.mxu0 0.0
        %1184 = vmatpush2.msra.mxu0 0.0
        %1185 = vmatprep.subr.mxu0 0.0
        %1186 = vmatpush2.msra.mxu0 0.0
        %1187 = vmatprep.subr.mxu0 0.0
        %1188 = vmatpush2.msra.mxu0 0.0
        %1189 = vmatprep.subr.mxu0 0.0
        %1190 = vmatpush2.msra.mxu0 0.0
        %1191 = vmatprep.subr.mxu0 0.0
        %1192 = vmatpush2.msra.mxu0 0.0
        %1193 = vmatprep.mubr.f32.mxu0 0.0
        %1194 = vmatmul.mubr.f32.gmra.mxu0 %v1127
        %v1195 = vpop.f32.mrf.mxu0
        %v1196 = vadd.f32 0.0, %v1195
        %v1197 = vpop.f32.mrf.mxu0
        %v1198 = vadd.f32 0.0, %v1197
        %1199 = vdwg.mxu0
        %v1202 = vcombine.low %v1196, %v1198
        %1204 = vst [vmem:[%s265] sm:$0x77] %v1202
        %s1205 = smul.u32 2, %s20
        %p1206 = scmp.lt.s32.totalorder %s21, 1
        %s1207 = scalar_select %p1206, %s21, 1
        %p1208 = scmp.lt.s32.totalorder %s1205, 1
        %s1209 = scalar_select %p1208, %s1205, 1
        %s1210 = smul.addr %s1207, 2
        %s1211 = sadd.s32 %s1209, %s1210
        %s1212 = smul.addr %s1211, 4
        %s1213 = scalar_lea.vmem %s4, %s1212
        // Predicated region
        $region41: #{tpu_custom_call.1} parent=35 // pred_check
          %p1214 = pneg %p147
        $region42: #{tpu_custom_call.1} parent=35 // pred_check_branch
          %1216 = sbr.rel (%p1214) target = $region44
        $region43: #{tpu_custom_call.1} parent=35 // pred_region
          %s1217 = smul.u32 2, %s20
        $region44: #{tpu_custom_call.1} parent=35 // pred_fallthru
          _
      $region36: #{tpu_custom_call.1} parent=5 // pred_fallthru
        _
      %p1218 = scmp.le.s32.totalorder 2, %s11
      // Predicated region
      $region45: #{tpu_custom_call.1} parent=5 // pred_check
        %p1219 = pneg %p1218
      $region46: #{tpu_custom_call.1} parent=5 // pred_check_branch
        %1221 = sbr.rel (%p1219) target = $region48
      $region47: #{tpu_custom_call.1} parent=5 // pred_region
        %s1222 = ssub.s32 %s11, 2
        // Predicated region
        $region49: #{tpu_custom_call.1} parent=47 // pred_check
          %p1223 = pneg %p153
        $region50: #{tpu_custom_call.1} parent=47 // pred_check_branch
          %1225 = sbr.rel (%p1223) target = $region52
        $region51: #{tpu_custom_call.1} parent=47 // pred_region
          %s1226 = smul.u32 2, %s22
          %p1227 = scmp.lt.s32.totalorder %s23, 1
          %s1228 = scalar_select %p1227, %s23, 1
          %p1229 = scmp.lt.s32.totalorder %s1226, 1
          %s1230 = scalar_select %p1229, %s1226, 1
          %s1231 = smul.addr %s1228, 2
          %s1232 = sadd.s32 %s1230, %s1231
          %s1233 = smul.addr %s1232, 4
          %s1234 = scalar_lea.vmem %s4, %s1233
        $region52: #{tpu_custom_call.1} parent=47 // pred_fallthru
          _
      $region48: #{tpu_custom_call.1} parent=5 // pred_fallthru
        _
    $region6: #{tpu_custom_call.1} parent=1 // loop_footer
      %s15 = sadd.s32 1, %s11
    $region7: #{tpu_custom_call.1} parent=1 // loop_footer_branch
      %10 = sbr.rel target = $region3
    $region8: #{tpu_custom_call.1} parent=1 // loop_exit
      _
    %1235 = vsyncpa [#allocation3], 1
    %s1236 = scalar_lea.sflag [#allocation3], 1
    %1237 = vsyncpa %s1236, 1

</llo_original>
